<compile_context>
chip_gen: v7x
topology: tpu7x:2x2x1
jax: 0.10.0
libtpu: 0.0.40
codegen_flags: <defaults>
</compile_context>

<pallas_src>
import numpy as np
import jax
import jax.numpy as jnp
from jax.experimental import pallas as pl
from jax.experimental.pallas import tpu as pltpu

_VMEM_LIMIT_BYTES = 32 * 1024 * 1024   # explicit scoped-VMEM request (portable v5e/v6e/v7x)
_VMEM_TILE_BUDGET = 12 * 1024 * 1024   # target per-step working set (double-buffered)


def _linear_upsample_matrix(l_in: int, factor: int) -> np.ndarray:
    """W (l_in, l_out) matching nn.Upsample(mode='linear', align_corners=True)."""
    l_out = l_in * factor
    W = np.zeros((l_in, l_out), dtype=np.float32)
    if l_out == 1:
        W[0, 0] = 1.0
        return W
    scale = (l_in - 1) / (l_out - 1)
    for j in range(l_out):
        pos = j * scale
        i0 = min(int(np.floor(pos)), l_in - 1)
        i1 = min(i0 + 1, l_in - 1)
        frac = pos - i0
        W[i0, j] += 1.0 - frac
        W[i1, j] += frac
    return W


def _choose_row_tile(rows: int, l_in: int, l_out: int, itemsize: int,
                     granule: int) -> int:
    """Largest row tile whose double-buffered footprint fits the VMEM budget."""
    w_bytes = 2 * l_in * l_out * itemsize
    tile = 2048
    while tile > granule and (2 * tile * (l_in + l_out) * itemsize + w_bytes
                              > _VMEM_TILE_BUDGET):
        tile //= 2
    if rows <= tile:
        return rows                        # single full-extent block
    return max(granule, (tile // granule) * granule)


def _matmul_kernel(a_ref, b_ref, o_ref):
    # a_ref @ b_ref on the MXU, f32 accumulation, cast to output dtype.
    o_ref[...] = jnp.dot(
        a_ref[...], b_ref[...], preferred_element_type=jnp.float32
    ).astype(o_ref.dtype)


def _compiler_params():
    return pltpu.CompilerParams(
        dimension_semantics=("parallel",),
        vmem_limit_bytes=_VMEM_LIMIT_BYTES,
    )


def upsample_linear(x: jax.Array, factor: int = 2) -> jax.Array:
    """x: (N, C, L) -> (N, C, L*factor); linear, align_corners=True."""
    n, c, l_in = x.shape
    l_out = l_in * factor
    rows = n * c

    # TODO(synk): for very large L (> ~1024) replace the dense (L_in x L_out)
    # matmul with a banded / VPU-lerp formulation (W has only 2 nonzeros per
    # column); the dense W inflates FLOPs by L_in/2 and grows as L_in^2.

    w_np = _linear_upsample_matrix(l_in, factor)
    w_dtype = jnp.bfloat16 if x.dtype == jnp.bfloat16 else jnp.float32
    itemsize = jnp.dtype(x.dtype).itemsize

    x2d = x.reshape(rows, l_in)

    if l_out % 128 == 0:
        # Direct path: output last dim already lane-aligned.
        w = jnp.asarray(w_np, dtype=w_dtype)
        tile_r = _choose_row_tile(rows, l_in, l_out, itemsize, granule=8)
        out2d = pl.pallas_call(
            _matmul_kernel,
            out_shape=jax.ShapeDtypeStruct((rows, l_out), x.dtype),
            grid_spec=pl.GridSpec(
                grid=(pl.cdiv(rows, tile_r),),
                in_specs=[
                    pl.BlockSpec((tile_r, l_in), lambda i: (i, 0)),
                    pl.BlockSpec((l_in, l_out), lambda i: (0, 0)),
                ],
                out_specs=pl.BlockSpec((tile_r, l_out), lambda i: (i, 0)),
            ),
            compiler_params=_compiler_params(),
        )(x2d, w)
        return out2d.reshape(n, c, l_out)

    # Lane-dense path: compute out.T = W.T @ x.T so the output's lane dim is
    # the (large) row dim -> unmasked stores even when l_out < 128.
    w_t = jnp.asarray(w_np.T, dtype=w_dtype)      # (l_out, l_in)
    x_t = x2d.T                                   # (l_in, rows)
    tile_r = _choose_row_tile(rows, l_in, l_out, itemsize, granule=128)
    out_t = pl.pallas_call(
        _matmul_kernel,
        out_shape=jax.ShapeDtypeStruct((l_out, rows), x.dtype),
        grid_spec=pl.GridSpec(
            grid=(pl.cdiv(rows, tile_r),),
            in_specs=[
                pl.BlockSpec((l_out, l_in), lambda i: (0, 0)),
                pl.BlockSpec((l_in, tile_r), lambda i: (0, i)),
            ],
            out_specs=pl.BlockSpec((l_out, tile_r), lambda i: (0, i)),
        ),
        compiler_params=_compiler_params(),
    )(w_t, x_t)
    return out_t.T.reshape(n, c, l_out)


def _reference(x: jax.Array, factor: int = 2) -> jax.Array:
    """Pure-JAX reference of nn.Upsample(linear, align_corners=True)."""
    n, c, l_in = x.shape
    l_out = l_in * factor
    if l_out == 1:
        return x[..., :1]
    scale = (l_in - 1) / (l_out - 1)
    pos = jnp.arange(l_out, dtype=jnp.float32) * scale
    i0 = jnp.clip(jnp.floor(pos).astype(jnp.int32), 0, l_in - 1)
    i1 = jnp.clip(i0 + 1, 0, l_in - 1)
    frac = pos - i0.astype(jnp.float32)
    return x[..., i0] * (1.0 - frac) + x[..., i1] * frac


if __name__ == "__main__":
    key = jax.random.PRNGKey(0)
    N, C, L = 2, 4, 16
    x = jax.random.normal(key, (N, C, L), dtype=jnp.float32)

    # l_out = 32 (< 128): exercises the lane-dense (transposed) path.
    out = jax.block_until_ready(upsample_linear(x, factor=2))
    assert out.shape == (N, C, L * 2), out.shape
    ref = _reference(x, factor=2)
    np.testing.assert_allclose(np.asarray(out), np.asarray(ref),
                               rtol=1e-5, atol=1e-5)

    # l_out = 128: exercises the direct lane-aligned path.
    x2 = jax.random.normal(jax.random.PRNGKey(1), (N, C, 64), dtype=jnp.float32)
    out2 = jax.block_until_ready(upsample_linear(x2, factor=2))
    ref2 = _reference(x2, factor=2)
    np.testing.assert_allclose(np.asarray(out2), np.asarray(ref2),
                               rtol=1e-5, atol=1e-5)

    print("KERNEL_OK")
</pallas_src>

<mosaic_0001>
module attributes {stable_mosaic.version = 11 : i64} {
  func.func @_matmul_kernel(%arg0: i32, %arg1: memref<32x16xf32, #tpu.memory_space<vmem>>, %arg2: memref<16x8xf32, #tpu.memory_space<vmem>>, %arg3: memref<32x8xf32, #tpu.memory_space<vmem>>) attributes {dimension_semantics = [#tpu.dimension_semantics<parallel>], iteration_bounds = array<i64: 1>, scalar_prefetch = 0 : i64, scratch_operands = 0 : i64, tpu.core_type = #tpu.core_type<tc>, window_params = [{pipeline_mode = #tpu.pipeline_mode<synchronous>, transform_indices = @transform_0, window_bounds = array<i64: 32, 16>}, {transform_indices = @transform_1, window_bounds = array<i64: 16, 8>}, {transform_indices = @transform_2, window_bounds = array<i64: 32, 8>}]} {
    %c0 = arith.constant 0 : index
    %c0_0 = arith.constant 0 : index
    %0 = vector.load %arg1[%c0, %c0_0] : memref<32x16xf32, #tpu.memory_space<vmem>>, vector<32x16xf32>
    %c0_1 = arith.constant 0 : index
    %c0_2 = arith.constant 0 : index
    %1 = vector.load %arg2[%c0_1, %c0_2] : memref<16x8xf32, #tpu.memory_space<vmem>>, vector<16x8xf32>
    %cst = arith.constant dense<0.000000e+00> : vector<32x8xf32>
    %2 = tpu.matmul %0, %1, %cst {dimension_numbers = #tpu.dot_dimension_numbers<[1], [0], [0], [1], [0, 0, 1, 1], [], []>} : vector<32x16xf32>, vector<16x8xf32>, vector<32x8xf32> -> vector<32x8xf32>
    %c0_3 = arith.constant 0 : index
    %c0_4 = arith.constant 0 : index
    %3 = vector.load %arg3[%c0_3, %c0_4] : memref<32x8xf32, #tpu.memory_space<vmem>>, vector<32x8xf32>
    tpu.vector_store %arg3[%c0_3, %c0_4], %2 {strides = array<i32>} : memref<32x8xf32, #tpu.memory_space<vmem>>, vector<32x8xf32>,
    return
  }
  func.func @transform_0(%arg0: i32) -> (i32, i32) {
    %c0_i32 = arith.constant 0 : i32
    %c0_i32_0 = arith.constant 0 : i32
    %c0_i32_1 = arith.constant 0 : i32
    return %c0_i32, %c0_i32_0 : i32, i32
  }
  func.func @transform_1(%arg0: i32) -> (i32, i32) {
    %c0_i32 = arith.constant 0 : i32
    %c0_i32_0 = arith.constant 0 : i32
    return %c0_i32, %arg0 : i32, i32
  }
  func.func @transform_2(%arg0: i32) -> (i32, i32) {
    %c0_i32 = arith.constant 0 : i32
    %c0_i32_0 = arith.constant 0 : i32
    return %c0_i32, %arg0 : i32, i32
  }
}

</mosaic_0001>

<llo_original>
// kernel: tpu_custom_call.1
$region0: #{tpu_custom_call.1}
  #allocation0 [shape = 'u32[]', space=smem, size = 0x4, offset = 0x4, fixed_abs, tag = 'smem constant byte address 0x4 - core index']
  #allocation1 [shape = 'u32[144,128]{1,0:T(1,128)}', space=vmem, size = 0x12000, scoped, tag = 'internal scratch']
  %s0 = inlined_call_operand.vmem [shape: f32[32,16], index: 0, kind: input, shape index: {}]
  %s1 = inlined_call_operand.vmem [shape: f32[16,8], index: 1, kind: input, shape index: {}]
  %s2 = inlined_call_operand.vmem [shape: f32[32,8], index: 2, kind: output, shape index: {}]
  %s3 = sld [smem:[#allocation0]]
  $region18: #{tpu_custom_call.1} parent=0
    _
  %s5 = ssub.s32 1, %s3
  %s6 = scalar_select 0, %s5, %s3
  // Predicated region
  $region2: #{tpu_custom_call.1} parent=0 // pred_check
    _
  $region3: #{tpu_custom_call.1} parent=0 // pred_check_branch
    %8 = sbr.rel (0) target = $region5
  $region4: #{tpu_custom_call.1} parent=0 // pred_region
    _
  $region5: #{tpu_custom_call.1} parent=0 // pred_fallthru
    _
  // Predicated region
  $region6: #{tpu_custom_call.1} parent=0 // pred_check
    _
  $region7: #{tpu_custom_call.1} parent=0 // pred_check_branch
    %10 = sbr.rel (0) target = $region9
  $region8: #{tpu_custom_call.1} parent=0 // pred_region
    _
  $region9: #{tpu_custom_call.1} parent=0 // pred_fallthru
    _
  %v11 = vld [vmem:[%s0] sm:$0xff]
  %v12 = vld [vmem:[%s0 + $0x8] sm:$0xff]
  %v13 = vld [vmem:[%s0 + $0x10] sm:$0xff]
  %v14 = vld [vmem:[%s0 + $0x18] sm:$0xff]
  %v15 = vld [vmem:[%s1] sm:$0xff]
  %v16 = vld [vmem:[%s1 + $0x8] sm:$0xff]
  %vm17 = vcmask 130048
  %v19 = vsel %vm17, %v11, 0
  %v22 = vsel %vm17, %v12, 0
  %v25 = vsel %vm17, %v13, 0
  %v28 = vsel %vm17, %v14, 0
  %30 = vmatprep.subr.mxu0 0.0
  %31 = vmatpush1.msra.mxu0 %v15
  %32 = vmatprep.subr.mxu0 0.0
  %33 = vmatpush1.msra.mxu0 %v16
  %34 = vmatprep.subr.mxu0 0.0
  %35 = vmatpush1.msra.mxu0 0.0
  %36 = vmatprep.subr.mxu0 0.0
  %37 = vmatpush1.msra.mxu0 0.0
  %38 = vmatprep.subr.mxu0 0.0
  %39 = vmatpush1.msra.mxu0 0.0
  %40 = vmatprep.subr.mxu0 0.0
  %41 = vmatpush1.msra.mxu0 0.0
  %42 = vmatprep.subr.mxu0 0.0
  %43 = vmatpush1.msra.mxu0 0.0
  %44 = vmatprep.subr.mxu0 0.0
  %45 = vmatpush1.msra.mxu0 0.0
  %46 = vmatprep.subr.mxu0 0.0
  %47 = vmatpush1.msra.mxu0 0.0
  %48 = vmatprep.subr.mxu0 0.0
  %49 = vmatpush1.msra.mxu0 0.0
  %50 = vmatprep.subr.mxu0 0.0
  %51 = vmatpush1.msra.mxu0 0.0
  %52 = vmatprep.subr.mxu0 0.0
  %53 = vmatpush1.msra.mxu0 0.0
  %54 = vmatprep.subr.mxu0 0.0
  %55 = vmatpush1.msra.mxu0 0.0
  %56 = vmatprep.subr.mxu0 0.0
  %57 = vmatpush1.msra.mxu0 0.0
  %58 = vmatprep.subr.mxu0 0.0
  %59 = vmatpush1.msra.mxu0 0.0
  %60 = vmatprep.subr.mxu0 0.0
  %61 = vmatpush1.msra.mxu0 0.0
  %62 = vmatprep.subr.mxu0 0.0
  %63 = vmatpush1.msra.mxu0 0.0
  %64 = vmatprep.subr.mxu0 0.0
  %65 = vmatpush1.msra.mxu0 0.0
  %66 = vmatprep.subr.mxu0 0.0
  %67 = vmatpush1.msra.mxu0 0.0
  %68 = vmatprep.subr.mxu0 0.0
  %69 = vmatpush1.msra.mxu0 0.0
  %70 = vmatprep.subr.mxu0 0.0
  %71 = vmatpush1.msra.mxu0 0.0
  %72 = vmatprep.subr.mxu0 0.0
  %73 = vmatpush1.msra.mxu0 0.0
  %74 = vmatprep.subr.mxu0 0.0
  %75 = vmatpush1.msra.mxu0 0.0
  %76 = vmatprep.subr.mxu0 0.0
  %77 = vmatpush1.msra.mxu0 0.0
  %78 = vmatprep.subr.mxu0 0.0
  %79 = vmatpush1.msra.mxu0 0.0
  %80 = vmatprep.subr.mxu0 0.0
  %81 = vmatpush1.msra.mxu0 0.0
  %82 = vmatprep.subr.mxu0 0.0
  %83 = vmatpush1.msra.mxu0 0.0
  %84 = vmatprep.subr.mxu0 0.0
  %85 = vmatpush1.msra.mxu0 0.0
  %86 = vmatprep.subr.mxu0 0.0
  %87 = vmatpush1.msra.mxu0 0.0
  %88 = vmatprep.subr.mxu0 0.0
  %89 = vmatpush1.msra.mxu0 0.0
  %90 = vmatprep.subr.mxu0 0.0
  %91 = vmatpush1.msra.mxu0 0.0
  %92 = vmatprep.subr.mxu0 0.0
  %93 = vmatpush1.msra.mxu0 0.0
  %94 = vmatprep.mubr.f32.mxu0 0.0
  %95 = vmatmul.mubr.f32.gmra.mrb[0].mxu0 %v19
  %v96 = vpop.f32.mrb[0].mxu0
  %v97 = vadd.f32 0.0, %v96
  %v98 = vpop.f32.mrb[0].mxu0
  %99 = vmatprep.mubr.f32.mxu0 0.0
  %100 = vmatmul.mubr.f32.gmra.mrb[0].mxu0 %v22
  %v101 = vpop.f32.mrb[0].mxu0
  %v102 = vadd.f32 0.0, %v101
  %v103 = vpop.f32.mrb[0].mxu0
  %104 = vmatprep.mubr.f32.mxu0 0.0
  %105 = vmatmul.mubr.f32.gmra.mrb[0].mxu0 %v25
  %v106 = vpop.f32.mrb[0].mxu0
  %v107 = vadd.f32 0.0, %v106
  %v108 = vpop.f32.mrb[0].mxu0
  %109 = vmatprep.mubr.f32.mxu0 0.0
  %110 = vmatmul.mubr.f32.gmra.mrb[0].mxu0 %v28
  %v111 = vpop.f32.mrb[0].mxu0
  %v112 = vadd.f32 0.0, %v111
  %v113 = vpop.f32.mrb[0].mxu0
  %114 = vdwg.mxu0
  %vm115 = vcmask 64512
  %116 = vst.msk [vmem:[%s2] sm:$0xff] %vm115, %v97
  %117 = vst.msk [vmem:[%s2 + $0x8] sm:$0xff] %vm115, %v102
  %118 = vst.msk [vmem:[%s2 + $0x10] sm:$0xff] %vm115, %v107
  %119 = vst.msk [vmem:[%s2 + $0x18] sm:$0xff] %vm115, %v112
  // Predicated region
  $region10: #{tpu_custom_call.1} parent=0 // pred_check
    _
  $region11: #{tpu_custom_call.1} parent=0 // pred_check_branch
    %121 = sbr.rel (0) target = $region13
  $region12: #{tpu_custom_call.1} parent=0 // pred_region
    _
  $region13: #{tpu_custom_call.1} parent=0 // pred_fallthru
    _
  // Predicated region
  $region14: #{tpu_custom_call.1} parent=0 // pred_check
    _
  $region15: #{tpu_custom_call.1} parent=0 // pred_check_branch
    %123 = sbr.rel (0) target = $region17
  $region16: #{tpu_custom_call.1} parent=0 // pred_region
    _
  $region17: #{tpu_custom_call.1} parent=0 // pred_fallthru
    _

</llo_original>
